<compile_context>
chip_gen: v7x
topology: tpu7x:2x2x1
jax: 0.10.0
libtpu: 0.0.40
codegen_flags: <defaults>
</compile_context>

<pallas_src>
import functools

import jax
import jax.numpy as jnp
from jax.experimental import pallas as pl
from jax.experimental.pallas import tpu as pltpu


def _sublane_multiple(dtype) -> int:
    """Row-tile granularity: sub-32-bit dtypes pack along sublanes."""
    size = jnp.dtype(dtype).itemsize
    if size >= 4:
        return 8
    if size == 2:
        return 16
    return 32


def _round_up(x: int, m: int) -> int:
    return ((x + m - 1) // m) * m


def _tpu_vmem_capacity_bytes() -> int:
    """Physical VMEM per TensorCore; conservative 64 MiB if the query fails."""
    try:
        info = pltpu.get_tpu_info()
        cap = int(getattr(info, "vmem_capacity_bytes", 0))
        if cap > 0:
            return cap
    except Exception:
        pass
    return 64 * 1024 * 1024


def _is_multi_tensorcore() -> bool:
    """Heuristic: v4 / v5p / v7x have 2 TensorCores per chip; v5e/v6e have 1."""
    try:
        kind = jax.devices()[0].device_kind.lower()
    except Exception:
        return False
    if "lite" in kind or "v5e" in kind or "v6e" in kind or "v6 lite" in kind:
        return False
    return any(tag in kind for tag in ("v4", "v5p", "v7", "7x"))


def _rmsnorm_kernel(x_ref, w_ref, o_ref, *, eps):
    # x_ref: (tile_rows, D) block in VMEM; w_ref: (1, D) f32 scale; o_ref: (tile_rows, D)
    x = x_ref[...].astype(jnp.float32)                  # f32 accumulation
    var = jnp.mean(x * x, axis=-1, keepdims=True)       # mean over D, no mean-subtraction
    inv = jax.lax.rsqrt(var + eps)
    o_ref[...] = (w_ref[...] * (x * inv)).astype(o_ref.dtype)


def rmsnorm(x, weight, eps=1e-6, max_row_tile=1024):
    """x: [B, T, D], weight: [D] -> [B, T, D] (matches PyTorch RMSNorm.forward)."""
    B, T, D = x.shape
    rows = B * T
    x2 = x.reshape(rows, D)
    # Pre-cast weight once; grid-invariant (1, D) f32 block stays resident.
    w2 = weight.astype(jnp.float32).reshape(1, D)

    x_bytes = jnp.dtype(x.dtype).itemsize
    o_bytes = x_bytes
    sub = _sublane_multiple(x.dtype)

    vmem_cap = _tpu_vmem_capacity_bytes()
    multi_tc = _is_multi_tensorcore()

    # --- generation-aware VMEM budget for the row tile ---
    if vmem_cap >= 100 * 1024 * 1024:        # v5e / v6e: 128 MiB VMEM
        vmem_budget = 80 * 1024 * 1024
        vmem_cap_limit = 96 * 1024 * 1024
    else:                                    # v7x (or unknown): 64 MiB VMEM
        vmem_budget = 36 * 1024 * 1024
        vmem_cap_limit = 48 * 1024 * 1024

    # per-row VMEM: double-buffered in + out tiles plus ONE f32 temporary.
    per_row_bytes = 2 * D * (x_bytes + o_bytes) + 4 * D
    tile = max(sub, min(max_row_tile, vmem_budget // per_row_bytes))
    tile = (tile // sub) * sub               # multiple of sublane packing
    rows_aligned = _round_up(rows, sub)
    tile = min(tile, rows_aligned)

    grid_rows = pl.cdiv(rows, tile)

    # --- megacore balancing: only on multi-TC parts, keep the grid even ---
    if multi_tc and rows > sub:
        if grid_rows == 1:
            tile = _round_up(pl.cdiv(rows, 2), sub)
        elif grid_rows % 2 == 1 and grid_rows <= 8:
            tile = max(sub, _round_up(pl.cdiv(rows, grid_rows + 1), sub))
        grid_rows = pl.cdiv(rows, tile)

    # --- honest scoped-VMEM request: real block footprint + small headroom ---
    # TODO(synk): no D-tiling fallback; for extreme D where even `sub` rows x D
    # exceeds the budget, a two-pass sum-of-squares accumulation over D tiles
    # would be needed.
    block_bytes = (2 * tile * D * x_bytes    # double-buffered input
                   + 2 * tile * D * o_bytes  # double-buffered output
                   + tile * D * 4            # one f32 intermediate
                   + D * 4)                  # weight
    vmem_limit = int(min(max(block_bytes + 4 * 1024 * 1024, 32 * 1024 * 1024),
                         vmem_cap_limit))

    cost = pl.CostEstimate(
        flops=3 * rows * D,
        transcendentals=rows,
        bytes_accessed=rows * D * (x_bytes + o_bytes) + D * 4,
    )

    # No padding: Pallas clips the partial last block's DMA and masks its
    # out-of-bounds stores; the garbage tail rows it computes are discarded.
    out2 = pl.pallas_call(
        functools.partial(_rmsnorm_kernel, eps=eps),
        out_shape=jax.ShapeDtypeStruct((rows, D), x.dtype),
        grid_spec=pltpu.PrefetchScalarGridSpec(
            num_scalar_prefetch=0,
            grid=(grid_rows,),
            in_specs=[
                pl.BlockSpec((tile, D), lambda i: (i, 0)),   # x rows (large tile)
                pl.BlockSpec((1, D), lambda i: (0, 0)),      # weight: grid-invariant
            ],
            out_specs=pl.BlockSpec((tile, D), lambda i: (i, 0)),
        ),
        compiler_params=pltpu.CompilerParams(
            dimension_semantics=("parallel",),
            vmem_limit_bytes=vmem_limit,
        ),
        cost_estimate=cost,
    )(x2, w2)

    return out2.reshape(B, T, D)


def rmsnorm_ref(x, weight, eps=1e-6):
    var = jnp.mean(jnp.square(x.astype(jnp.float32)), axis=-1, keepdims=True)
    y = x.astype(jnp.float32) * jax.lax.rsqrt(var + eps)
    return (weight.astype(jnp.float32) * y).astype(x.dtype)


if __name__ == "__main__":
    key = jax.random.PRNGKey(0)

    # Small shape consistent with the module: x is [B, T, D].
    B, T, D = 2, 8, 32
    kx, kw, kx2 = jax.random.split(key, 3)
    x = jax.random.normal(kx, (B, T, D), dtype=jnp.float32)
    # Module init: weight = ones(hidden_size). Perturb deterministically so the
    # scale actually matters in the test.
    weight = jnp.ones((D,), dtype=jnp.float32) + 0.1 * jax.random.normal(
        kw, (D,), dtype=jnp.float32)

    out = jax.block_until_ready(rmsnorm(x, weight))
    ref = rmsnorm_ref(x, weight)
    assert out.shape == (B, T, D)
    assert jnp.allclose(out, ref, atol=1e-5, rtol=1e-5), "mismatch vs reference"

    # Ragged row count exercises the partial-final-block (masked store) path.
    Br, Tr = 3, 5
    xr = jax.random.normal(kx2, (Br, Tr, D), dtype=jnp.float32)
    out_r = jax.block_until_ready(rmsnorm(xr, weight))
    ref_r = rmsnorm_ref(xr, weight)
    assert out_r.shape == (Br, Tr, D)
    assert jnp.allclose(out_r, ref_r, atol=1e-5, rtol=1e-5), "mismatch (ragged) vs reference"

    print("KERNEL_OK")
</pallas_src>

<mosaic_0001>
module attributes {stable_mosaic.version = 11 : i64} {
  func.func @_rmsnorm_kernel(%arg0: i32, %arg1: memref<16x32xf32, #tpu.memory_space<vmem>>, %arg2: memref<1x32xf32, #tpu.memory_space<vmem>>, %arg3: memref<16x32xf32, #tpu.memory_space<vmem>>) attributes {dimension_semantics = [#tpu.dimension_semantics<parallel>], iteration_bounds = array<i64: 1>, scalar_prefetch = 0 : i64, scratch_operands = 0 : i64, tpu.core_type = #tpu.core_type<tc>, window_params = [{transform_indices = @transform_0, window_bounds = array<i64: 16, 32>}, {pipeline_mode = #tpu.pipeline_mode<synchronous>, transform_indices = @transform_1, window_bounds = array<i64: 1, 32>}, {transform_indices = @transform_2, window_bounds = array<i64: 16, 32>}]} {
    %c0 = arith.constant 0 : index
    %c0_0 = arith.constant 0 : index
    %0 = vector.load %arg1[%c0, %c0_0] : memref<16x32xf32, #tpu.memory_space<vmem>>, vector<16x32xf32>
    %1 = arith.mulf %0, %0 : vector<16x32xf32>
    %cst = arith.constant dense<0.000000e+00> : vector<16xf32>
    %2 = vector.multi_reduction <add>, %1, %cst [1] : vector<16x32xf32> to vector<16xf32>
    %3 = vector.shape_cast %2 : vector<16xf32> to vector<16x1xf32>
    %cst_1 = arith.constant 3.200000e+01 : f32
    %4 = vector.broadcast %cst_1 : f32 to vector<16x1xf32>
    %5 = arith.divf %3, %4 : vector<16x1xf32>
    %cst_2 = arith.constant 9.99999997E-7 : f32
    %6 = vector.broadcast %cst_2 : f32 to vector<16x1xf32>
    %7 = arith.addf %5, %6 : vector<16x1xf32>
    %8 = math.rsqrt %7 : vector<16x1xf32>
    %c0_3 = arith.constant 0 : index
    %c0_4 = arith.constant 0 : index
    %9 = vector.load %arg2[%c0_3, %c0_4] : memref<1x32xf32, #tpu.memory_space<vmem>>, vector<1x32xf32>
    %10 = vector.broadcast %8 : vector<16x1xf32> to vector<16x32xf32>
    %11 = arith.mulf %0, %10 : vector<16x32xf32>
    %12 = vector.broadcast %9 : vector<1x32xf32> to vector<16x32xf32>
    %13 = arith.mulf %12, %11 : vector<16x32xf32>
    %c0_5 = arith.constant 0 : index
    %c0_6 = arith.constant 0 : index
    %14 = vector.load %arg3[%c0_5, %c0_6] : memref<16x32xf32, #tpu.memory_space<vmem>>, vector<16x32xf32>
    tpu.vector_store %arg3[%c0_5, %c0_6], %13 {strides = array<i32>} : memref<16x32xf32, #tpu.memory_space<vmem>>, vector<16x32xf32>,
    return
  }
  func.func @transform_0(%arg0: i32) -> (i32, i32) {
    %c0_i32 = arith.constant 0 : i32
    %c0_i32_0 = arith.constant 0 : i32
    return %arg0, %c0_i32 : i32, i32
  }
  func.func @transform_1(%arg0: i32) -> (i32, i32) {
    %c0_i32 = arith.constant 0 : i32
    %c0_i32_0 = arith.constant 0 : i32
    %c0_i32_1 = arith.constant 0 : i32
    return %c0_i32, %c0_i32_0 : i32, i32
  }
  func.func @transform_2(%arg0: i32) -> (i32, i32) {
    %c0_i32 = arith.constant 0 : i32
    %c0_i32_0 = arith.constant 0 : i32
    return %arg0, %c0_i32 : i32, i32
  }
}

</mosaic_0001>

<llo_original>
// kernel: tpu_custom_call.1
$region0: #{tpu_custom_call.1}
  #allocation0 [shape = 'u32[]', space=smem, size = 0x4, offset = 0x4, fixed_abs, tag = 'smem constant byte address 0x4 - core index']
  #allocation1 [shape = 'u32[144,128]{1,0:T(1,128)}', space=vmem, size = 0x12000, scoped, tag = 'internal scratch']
  %s0 = inlined_call_operand.hbm [shape: f32[16,32], index: 0, kind: input, shape index: {}]
  %s1 = inlined_call_operand.vmem [shape: f32[1,32], index: 1, kind: input, shape index: {}]
  %s2 = inlined_call_operand.hbm [shape: f32[16,32], index: 2, kind: output, shape index: {}]
  %s3 = sld [smem:[#allocation0]]
  $region22: #{tpu_custom_call.1} parent=0
    _
  %s5 = ssub.s32 1, %s3
  %s6 = scalar_select 0, %s5, %s3
  $region1: #{tpu_custom_call.1} parent=0
    #allocation2 [shape = 'u8[8192]{0}', space=vmem, size = 0x2000, scoped, tag = 'input window, operand 0, single buffered']
    #allocation3 [shape = 's32[1]{0}', space=sflag, size = 0x4, scoped, tag = 'scoped memory for tpu_custom_call.1']
    #allocation4 [shape = 's32[1]{0}', space=sflag, size = 0x4, scoped, tag = 'scoped memory for tpu_custom_call.1']
    #allocation5 [shape = 'u8[8192]{0}', space=vmem, size = 0x2000, scoped, tag = 'output window, operand 0, single buffered']
    %7 = vsyncpa [#allocation3], 0
    %8 = vsyncpa [#allocation4], 0
    // Predicated region
    $region2: #{tpu_custom_call.1} parent=1 // pred_check
      _
    $region3: #{tpu_custom_call.1} parent=1 // pred_check_branch
      %10 = sbr.rel (0) target = $region5
    $region4: #{tpu_custom_call.1} parent=1 // pred_region
      %s12 = ssub.s32 256, 256
      %13 = vsyncadd [#allocation3], %s12
      %s14 = sshll.u32 [#allocation2], 4
      %s15 = int_to_ptr.vmem [resolvable:$true] %s14
      %20 = dma.hbm_to_vmem [thread:$0]  %s0, 256, %s15, [#allocation3], 128, 128, 8
    $region5: #{tpu_custom_call.1} parent=1 // pred_fallthru
      _
    // Predicated region
    $region6: #{tpu_custom_call.1} parent=1 // pred_check
      _
    $region7: #{tpu_custom_call.1} parent=1 // pred_check_branch
      %22 = sbr.rel (0) target = $region9
    $region8: #{tpu_custom_call.1} parent=1 // pred_region
      _
    $region9: #{tpu_custom_call.1} parent=1 // pred_fallthru
      _
    // Predicated region
    $region10: #{tpu_custom_call.1} parent=1 // pred_check
      _
    $region11: #{tpu_custom_call.1} parent=1 // pred_check_branch
      %24 = sbr.rel (0) target = $region13
    $region12: #{tpu_custom_call.1} parent=1 // pred_region
      %25 = dma.done [#allocation3], 256
    $region13: #{tpu_custom_call.1} parent=1 // pred_fallthru
      _
    %v26 = vld [vmem:[#allocation2] sm:$0xff]
    %v27 = vld [vmem:[#allocation2 + $0x8] sm:$0xff]
    %v28 = vmul.f32 %v26, %v26
    %v29 = vmul.f32 %v27, %v27
    %vm30 = vcmask 261120
    %v31 = vsel %vm30, %v28, 0.0
    %32 = vadd.xlane.f32.xlu0 %v31
    %v33 = vpop.xlane.xlu0 %32
    %v34 = vsel %vm30, %v29, 0.0
    %35 = vadd.xlane.f32.xlu0 %v34
    %v36 = vpop.xlane.xlu0 %35
    %v37 = vrcp.pop 32.0
    %v38 = vmul.f32 %v33, %v37
    %v39 = vmul.f32 %v36, %v37
    %v40 = vadd.f32 %v38, 1e-06
    %v41 = vadd.f32 %v39, 1e-06
    %v42 = vrsqrt.pop %v40
    %v43 = vrsqrt.pop %v41
    %v44 = vld [vmem:[%s1] sm:$0x1]
    %v45 = vmul.f32 %v26, %v42
    %v46 = vmul.f32 %v27, %v43
    %v48 = vlaneseq
    %v49 = vshrl.u32 %v48, 7
    %v50 = vsub.s32 0, %v49
    %v51 = vrot.slane %v44, %v50
    %v53 = vmul.f32 %v51, %v45
    %v54 = vmul.f32 %v51, %v46
    %55 = vst.msk [vmem:[#allocation5] sm:$0xff] %vm30, %v53
    %56 = vst.msk [vmem:[#allocation5 + $0x8] sm:$0xff] %vm30, %v54
    // Predicated region
    $region14: #{tpu_custom_call.1} parent=1 // pred_check
      _
    $region15: #{tpu_custom_call.1} parent=1 // pred_check_branch
      %58 = sbr.rel (0) target = $region17
    $region16: #{tpu_custom_call.1} parent=1 // pred_region
      %s60 = ssub.s32 256, 256
      %61 = vsyncadd [#allocation4], %s60
      %s62 = sshll.u32 [#allocation5], 4
      %s63 = int_to_ptr.vmem [resolvable:$true] %s62
      %68 = dma.vmem_to_hbm [thread:$0]  %s63, 256, %s2, [#allocation4], 128, 128, 8
    $region17: #{tpu_custom_call.1} parent=1 // pred_fallthru
      _
    // Predicated region
    $region18: #{tpu_custom_call.1} parent=1 // pred_check
      _
    $region19: #{tpu_custom_call.1} parent=1 // pred_check_branch
      %70 = sbr.rel (0) target = $region21
    $region20: #{tpu_custom_call.1} parent=1 // pred_region
      %71 = dma.done [#allocation4], 256
    $region21: #{tpu_custom_call.1} parent=1 // pred_fallthru
      _
    %72 = vsyncpa [#allocation3], 1
    %73 = vsyncpa [#allocation4], 1

</llo_original>
